<compile_context>
chip_gen: v6e
topology: v6e:2x2x1
jax: 0.10.0
libtpu: 0.0.40
codegen_flags: <defaults>
</compile_context>

<pallas_src>
import jax
import jax.numpy as jnp
import numpy as np
from jax.experimental import pallas as pl
from jax.experimental.pallas import tpu as pltpu


def _compose_kernel(x_ref, w1_ref, b1_ref, w2_ref, b2_ref,
                    first_out_ref, second_out_ref):
    # first(x): h = x @ W1 + b1  (bf16 MXU operands, f32 accumulation).
    # x arrives in f32 and is cast to bf16 on the VPU, hidden under the MXU.
    x_bf = x_ref[...].astype(jnp.bfloat16)
    h = jnp.dot(x_bf, w1_ref[...], preferred_element_type=jnp.float32)
    h = h + b1_ref[...]                       # (1, c_mid) broadcast over rows

    # Cached intermediate (bf16 by default -> half the HBM write bytes).
    first_out_ref[...] = h.astype(first_out_ref.dtype)

    # second(h): y = h @ W2 + b2.  h is rounded to bf16 once for the MXU; with
    # the default bf16 first_out this equals the stored cached value.
    h_bf = h.astype(jnp.bfloat16)
    y = jnp.dot(h_bf, w2_ref[...], preferred_element_type=jnp.float32)
    y = y + b2_ref[...]
    second_out_ref[...] = y.astype(second_out_ref.dtype)


def _round_up(v, m):
    return ((v + m - 1) // m) * m


def _itemsize(dt):
    return np.dtype(dt).itemsize


def _choose_tm(n, tm):
    """8-row aligned batch tile; >= 2 grid steps when possible (v7x 2 TCs)."""
    tm_eff = max(8, min(tm, _round_up(n, 8)))
    if n > 8 and pl.cdiv(n, tm_eff) < 2:
        tm_eff = max(8, _round_up(pl.cdiv(n, 2), 8))
    return tm_eff


def compose_forward(x, w1, b1, w2, b2, *, tm=512,
                    first_out_dtype=jnp.bfloat16,
                    second_out_dtype=jnp.bfloat16):
    """Fused forward of CustomCompose(first=Linear, second=Linear).

    Returns (first_out, second_out), matching the PyTorch module's cached
    attributes and return value.  The batch dim is tiled (default 512 rows);
    weights/biases are VMEM-resident across grid steps.
    """
    n, c_in = x.shape
    c_mid = w1.shape[-1]
    c_out = w2.shape[-1]

    # MXU operand dtype.  Weights should already be bf16 (cast once at model
    # init); these are no-ops in that case.
    if w1.dtype != jnp.bfloat16:
        w1 = w1.astype(jnp.bfloat16)
    if w2.dtype != jnp.bfloat16:
        w2 = w2.astype(jnp.bfloat16)
    b1 = b1.astype(jnp.float32).reshape(1, c_mid)
    b2 = b2.astype(jnp.float32).reshape(1, c_out)

    x_b = _itemsize(x.dtype)
    fo_b = _itemsize(first_out_dtype)
    so_b = _itemsize(second_out_dtype)

    def _vmem_bytes(tm_):
        # Streaming tiles are double-buffered by the Pallas pipeliner.
        tiles = 2 * tm_ * (c_in * x_b + c_mid * fo_b + c_out * so_b)
        # Constant-index weights/biases (also 2 buffers at default depth).
        # NOTE: on v7x these could be single-buffered via
        # pipeline_mode=pl.Buffered(1); moot at these shapes, left default.
        resident = 2 * ((c_in * c_mid + c_mid * c_out) * 2
                        + (c_mid + c_out) * 4)
        return tiles + resident

    try:
        vmem_cap = int(pltpu.get_tpu_info().vmem_capacity_bytes)
    except Exception:
        vmem_cap = 64 << 20                 # conservative: v7x per-TC VMEM
    budget = vmem_cap - (16 << 20)          # headroom for compiler scratch

    tm_eff = _choose_tm(n, tm)
    while _vmem_bytes(tm_eff) > budget and tm_eff > 8:
        tm_eff = max(8, _round_up(tm_eff // 2, 8))
    if _vmem_bytes(tm_eff) > budget:
        # TODO(synk): tile c_mid / c_out with extra "arbitrary" grid axes and
        # an f32 VMEM accumulator when the resident weights alone exceed VMEM.
        raise NotImplementedError(
            "weights too large for the VMEM-resident fused kernel")

    n_tiles = pl.cdiv(n, tm_eff)
    vmem_limit = min(budget,
                     max(32 << 20, int(1.25 * _vmem_bytes(tm_eff)) + (2 << 20)))

    flops = 2 * n * (c_in * c_mid + c_mid * c_out)
    bytes_accessed = (n * c_in * x_b
                      + (c_in * c_mid + c_mid * c_out) * 2
                      + (c_mid + c_out) * 4
                      + n * c_mid * fo_b
                      + n * c_out * so_b)
    cost = pl.CostEstimate(flops=flops, transcendentals=0,
                           bytes_accessed=bytes_accessed)

    first_out, second_out = pl.pallas_call(
        _compose_kernel,
        out_shape=(
            jax.ShapeDtypeStruct((n, c_mid), first_out_dtype),
            jax.ShapeDtypeStruct((n, c_out), second_out_dtype),
        ),
        grid=(n_tiles,),
        in_specs=[
            pl.BlockSpec((tm_eff, c_in), lambda i: (i, 0)),   # x: streamed tiles
            pl.BlockSpec((c_in, c_mid), lambda i: (0, 0)),    # W1: VMEM-resident
            pl.BlockSpec((1, c_mid), lambda i: (0, 0)),       # b1: VMEM-resident
            pl.BlockSpec((c_mid, c_out), lambda i: (0, 0)),   # W2: VMEM-resident
            pl.BlockSpec((1, c_out), lambda i: (0, 0)),       # b2: VMEM-resident
        ],
        out_specs=(
            pl.BlockSpec((tm_eff, c_mid), lambda i: (i, 0)),
            pl.BlockSpec((tm_eff, c_out), lambda i: (i, 0)),
        ),
        compiler_params=pltpu.CompilerParams(
            dimension_semantics=("parallel",),   # batch tiles are independent
            vmem_limit_bytes=vmem_limit,
        ),
        cost_estimate=cost,
    )(x, w1, b1, w2, b2)

    return first_out, second_out


class CustomCompose:
    """JAX/Pallas analogue of the PyTorch CustomCompose module.

    `first`/`second` are dense Linear maps over scalar irreps; forward()
    returns second(first(x)) and caches first_out / second_out, mirroring the
    .clone() caching of the reference module.
    """

    def __init__(self, c_in, c_mid, c_out, key):
        k1, k2, k3, k4 = jax.random.split(key, 4)
        # Weights stored bf16 once at init (MXU operand dtype); biases f32.
        self.w1 = (jax.random.normal(k1, (c_in, c_mid), jnp.float32)
                   / jnp.sqrt(c_in)).astype(jnp.bfloat16)
        self.b1 = jax.random.normal(k2, (1, c_mid), jnp.float32) * 0.01
        self.w2 = (jax.random.normal(k3, (c_mid, c_out), jnp.float32)
                   / jnp.sqrt(c_mid)).astype(jnp.bfloat16)
        self.b2 = jax.random.normal(k4, (1, c_out), jnp.float32) * 0.01
        self.irreps_in = f"{c_in}x0e"    # mimic first.irreps_in
        self.irreps_out = f"{c_out}x0e"  # mimic second.irreps_out
        self.first_out = None
        self.second_out = None

    def __call__(self, x):
        first_out, second_out = compose_forward(
            x, self.w1, self.b1, self.w2, self.b2)
        # Mirror the .clone() caching semantics of the PyTorch module.
        self.first_out = first_out
        self.second_out = second_out
        return second_out


if __name__ == "__main__":
    key = jax.random.PRNGKey(0)
    kx, kp, kx2 = jax.random.split(key, 3)

    # Small, lane-dense problem: 128-wide feature dims, a few hundred rows.
    N, C_IN, C_MID, C_OUT = 384, 128, 128, 128
    x = jax.random.normal(kx, (N, C_IN), jnp.float32)

    model = CustomCompose(C_IN, C_MID, C_OUT, kp)
    y = model(x)
    jax.block_until_ready(y)
    assert model.first_out.shape == (N, C_MID)
    assert y.shape == (N, C_OUT)

    # Reference with the same bf16-operand / f32-accumulate / bf16-output recipe.
    h_f32 = jnp.dot(x.astype(jnp.bfloat16), model.w1,
                    preferred_element_type=jnp.float32) + model.b1
    h_ref = h_f32.astype(jnp.bfloat16)
    y_ref = (jnp.dot(h_ref, model.w2, preferred_element_type=jnp.float32)
             + model.b2).astype(jnp.bfloat16)
    assert jnp.allclose(model.first_out.astype(jnp.float32),
                        h_ref.astype(jnp.float32), atol=2e-2, rtol=2e-2)
    assert jnp.allclose(y.astype(jnp.float32), y_ref.astype(jnp.float32),
                        atol=2e-2, rtol=2e-2)

    # Sanity vs. pure f32 math (looser: bf16 rounding of inputs and outputs).
    w1f, w2f = model.w1.astype(jnp.float32), model.w2.astype(jnp.float32)
    h_full = x @ w1f + model.b1
    y_full = h_full @ w2f + model.b2
    assert jnp.allclose(y.astype(jnp.float32), y_full, atol=5e-1, rtol=5e-2)

    # Ragged batch (n % tile != 0): no wrapper-side pad/slice, Pallas masks
    # the tail block's stores.
    x2 = jax.random.normal(kx2, (200, C_IN), jnp.float32)
    y2 = model(x2)
    jax.block_until_ready(y2)
    assert y2.shape == (200, C_OUT)
    y2_full = (x2 @ w1f + model.b1) @ w2f + model.b2
    assert jnp.allclose(y2.astype(jnp.float32), y2_full, atol=5e-1, rtol=5e-2)

    print("KERNEL_OK")
</pallas_src>

<mosaic_0001>
module attributes {stable_mosaic.version = 11 : i64} {
  func.func @_compose_kernel(%arg0: i32, %arg1: memref<192x128xf32, #tpu.memory_space<vmem>>, %arg2: memref<128x128xbf16, #tpu.memory_space<vmem>>, %arg3: memref<1x128xf32, #tpu.memory_space<vmem>>, %arg4: memref<128x128xbf16, #tpu.memory_space<vmem>>, %arg5: memref<1x128xf32, #tpu.memory_space<vmem>>, %arg6: memref<192x128xbf16, #tpu.memory_space<vmem>>, %arg7: memref<192x128xbf16, #tpu.memory_space<vmem>>) attributes {dimension_semantics = [#tpu.dimension_semantics<parallel>], iteration_bounds = array<i64: 2>, scalar_prefetch = 0 : i64, scratch_operands = 0 : i64, tpu.core_type = #tpu.core_type<tc>, window_params = [{transform_indices = @transform_0, window_bounds = array<i64: 192, 128>}, {pipeline_mode = #tpu.pipeline_mode<synchronous>, transform_indices = @transform_1, window_bounds = array<i64: 128, 128>}, {pipeline_mode = #tpu.pipeline_mode<synchronous>, transform_indices = @transform_2, window_bounds = array<i64: 1, 128>}, {pipeline_mode = #tpu.pipeline_mode<synchronous>, transform_indices = @transform_3, window_bounds = array<i64: 128, 128>}, {pipeline_mode = #tpu.pipeline_mode<synchronous>, transform_indices = @transform_4, window_bounds = array<i64: 1, 128>}, {transform_indices = @transform_5, window_bounds = array<i64: 192, 128>}, {transform_indices = @transform_6, window_bounds = array<i64: 192, 128>}]} {
    %c0 = arith.constant 0 : index
    %c0_0 = arith.constant 0 : index
    %0 = vector.load %arg1[%c0, %c0_0] : memref<192x128xf32, #tpu.memory_space<vmem>>, vector<192x128xf32>
    %1 = arith.truncf %0 : vector<192x128xf32> to vector<192x128xbf16>
    %c0_1 = arith.constant 0 : index
    %c0_2 = arith.constant 0 : index
    %2 = vector.load %arg2[%c0_1, %c0_2] : memref<128x128xbf16, #tpu.memory_space<vmem>>, vector<128x128xbf16>
    %cst = arith.constant dense<0.000000e+00> : vector<192x128xf32>
    %3 = tpu.matmul %1, %2, %cst {dimension_numbers = #tpu.dot_dimension_numbers<[1], [0], [0], [1], [0, 0, 1, 1], [], []>} : vector<192x128xbf16>, vector<128x128xbf16>, vector<192x128xf32> -> vector<192x128xf32>
    %c0_3 = arith.constant 0 : index
    %c0_4 = arith.constant 0 : index
    %4 = vector.load %arg3[%c0_3, %c0_4] : memref<1x128xf32, #tpu.memory_space<vmem>>, vector<1x128xf32>
    %5 = vector.broadcast %4 : vector<1x128xf32> to vector<192x128xf32>
    %6 = arith.addf %3, %5 : vector<192x128xf32>
    %7 = arith.truncf %6 : vector<192x128xf32> to vector<192x128xbf16>
    %c0_5 = arith.constant 0 : index
    %c0_6 = arith.constant 0 : index
    %8 = vector.load %arg6[%c0_5, %c0_6] : memref<192x128xbf16, #tpu.memory_space<vmem>>, vector<192x128xbf16>
    tpu.vector_store %arg6[%c0_5, %c0_6], %7 {strides = array<i32>} : memref<192x128xbf16, #tpu.memory_space<vmem>>, vector<192x128xbf16>,
    %9 = arith.truncf %6 : vector<192x128xf32> to vector<192x128xbf16>
    %c0_7 = arith.constant 0 : index
    %c0_8 = arith.constant 0 : index
    %10 = vector.load %arg4[%c0_7, %c0_8] : memref<128x128xbf16, #tpu.memory_space<vmem>>, vector<128x128xbf16>
    %cst_9 = arith.constant dense<0.000000e+00> : vector<192x128xf32>
    %11 = tpu.matmul %9, %10, %cst_9 {dimension_numbers = #tpu.dot_dimension_numbers<[1], [0], [0], [1], [0, 0, 1, 1], [], []>} : vector<192x128xbf16>, vector<128x128xbf16>, vector<192x128xf32> -> vector<192x128xf32>
    %c0_10 = arith.constant 0 : index
    %c0_11 = arith.constant 0 : index
    %12 = vector.load %arg5[%c0_10, %c0_11] : memref<1x128xf32, #tpu.memory_space<vmem>>, vector<1x128xf32>
    %13 = vector.broadcast %12 : vector<1x128xf32> to vector<192x128xf32>
    %14 = arith.addf %11, %13 : vector<192x128xf32>
    %15 = arith.truncf %14 : vector<192x128xf32> to vector<192x128xbf16>
    %c0_12 = arith.constant 0 : index
    %c0_13 = arith.constant 0 : index
    %16 = vector.load %arg7[%c0_12, %c0_13] : memref<192x128xbf16, #tpu.memory_space<vmem>>, vector<192x128xbf16>
    tpu.vector_store %arg7[%c0_12, %c0_13], %15 {strides = array<i32>} : memref<192x128xbf16, #tpu.memory_space<vmem>>, vector<192x128xbf16>,
    return
  }
  func.func @transform_0(%arg0: i32) -> (i32, i32) {
    %c0_i32 = arith.constant 0 : i32
    %c0_i32_0 = arith.constant 0 : i32
    return %arg0, %c0_i32 : i32, i32
  }
  func.func @transform_1(%arg0: i32) -> (i32, i32) {
    %c0_i32 = arith.constant 0 : i32
    %c0_i32_0 = arith.constant 0 : i32
    %c0_i32_1 = arith.constant 0 : i32
    return %c0_i32, %c0_i32_0 : i32, i32
  }
  func.func @transform_2(%arg0: i32) -> (i32, i32) {
    %c0_i32 = arith.constant 0 : i32
    %c0_i32_0 = arith.constant 0 : i32
    %c0_i32_1 = arith.constant 0 : i32
    return %c0_i32, %c0_i32_0 : i32, i32
  }
  func.func @transform_3(%arg0: i32) -> (i32, i32) {
    %c0_i32 = arith.constant 0 : i32
    %c0_i32_0 = arith.constant 0 : i32
    %c0_i32_1 = arith.constant 0 : i32
    return %c0_i32, %c0_i32_0 : i32, i32
  }
  func.func @transform_4(%arg0: i32) -> (i32, i32) {
    %c0_i32 = arith.constant 0 : i32
    %c0_i32_0 = arith.constant 0 : i32
    %c0_i32_1 = arith.constant 0 : i32
    return %c0_i32, %c0_i32_0 : i32, i32
  }
  func.func @transform_5(%arg0: i32) -> (i32, i32) {
    %c0_i32 = arith.constant 0 : i32
    %c0_i32_0 = arith.constant 0 : i32
    return %arg0, %c0_i32 : i32, i32
  }
  func.func @transform_6(%arg0: i32) -> (i32, i32) {
    %c0_i32 = arith.constant 0 : i32
    %c0_i32_0 = arith.constant 0 : i32
    return %arg0, %c0_i32 : i32, i32
  }
}

</mosaic_0001>

<llo_original>
// kernel: tpu_custom_call.1
$region0: #{tpu_custom_call.1}
  #allocation0 [shape = 'u32[]', space=smem, size = 0x4, offset = 0x4, fixed_abs, tag = 'smem constant byte address 0x4 - core index']
  #allocation1 [shape = 'u32[144,128]{1,0:T(1,128)}', space=vmem, size = 0x12000, scoped, tag = 'internal scratch']
  %s0 = inlined_call_operand.hbm [shape: f32[384,128], index: 0, kind: input, shape index: {}]
  %s1 = inlined_call_operand.hbm [shape: bf16[128,128], index: 1, kind: input, shape index: {}]
  %s2 = inlined_call_operand.vmem [shape: f32[1,128], index: 2, kind: input, shape index: {}]
  %s3 = inlined_call_operand.hbm [shape: bf16[128,128], index: 3, kind: input, shape index: {}]
  %s4 = inlined_call_operand.vmem [shape: f32[1,128], index: 4, kind: input, shape index: {}]
  %s5 = inlined_call_operand.hbm [shape: bf16[384,128], index: 5, kind: output, shape index: {0}]
  %s6 = inlined_call_operand.hbm [shape: bf16[384,128], index: 6, kind: output, shape index: {1}]
  %7 = xla_tuple %s5, %s6
  %s8 = sld [smem:[#allocation0]]
  $region73: #{tpu_custom_call.1} parent=0
    _
  %s10 = ssub.s32 1, %s8
  %s11 = scalar_select 0, %s10, %s8
  $region1: #{tpu_custom_call.1} parent=0
    #allocation2 [shape = 'u8[196608]{0}', space=vmem, size = 0x30000, scoped, tag = 'input window, operand 0']
    #allocation3 [shape = 's32[2]{0}', space=sflag, size = 0x8, scoped, tag = 'scoped memory for tpu_custom_call.1']
    #allocation4 [shape = 's32[2]{0}', space=sflag, size = 0x8, scoped, tag = 'scoped memory for tpu_custom_call.1']
    #allocation5 [shape = 'u8[32768]{0}', space=vmem, size = 0x8000, scoped, tag = 'input window, operand 1, single buffered']
    #allocation6 [shape = 's32[1]{0}', space=sflag, size = 0x4, scoped, tag = 'scoped memory for tpu_custom_call.1']
    #allocation7 [shape = 'u8[32768]{0}', space=vmem, size = 0x8000, scoped, tag = 'input window, operand 3, single buffered']
    #allocation8 [shape = 'u8[98304]{0}', space=vmem, size = 0x18000, scoped, tag = 'output window, operand 0']
    #allocation9 [shape = 'u8[98304]{0}', space=vmem, size = 0x18000, scoped, tag = 'output window, operand 1']
    #allocation10 [shape = 's32[2]{0}', space=sflag, size = 0x8, scoped, tag = 'scoped memory for tpu_custom_call.1']
    %12 = vsyncpa [#allocation3], 0
    %s13 = scalar_lea.sflag [#allocation3], 1
    %14 = vsyncpa %s13, 0
    %15 = vsyncpa [#allocation6], 0
    %16 = vsyncpa [#allocation4], 0
    %s17 = scalar_lea.sflag [#allocation4], 1
    %18 = vsyncpa %s17, 0
    %19 = vsyncpa [#allocation10], 0
    %s20 = scalar_lea.sflag [#allocation10], 1
    %21 = vsyncpa %s20, 0
    loop: start=0, step=1, limit=4
    $region2: #{tpu_custom_call.1} parent=1 // loop_pre_header
      _
    $region3: #{tpu_custom_call.1} parent=1 // loop_header
      %s23 = sphi 0, %s27
      %p24 = scmp.ge.s32.totalorder %s23, 4
      %s33 = sphi 0, %s35
      %s36 = sphi 0, %s33
      %s37 = sphi 0, %s36
      %s53 = sphi 0, %s37
      %s57 = sphi 0, %s57
      %s59 = sphi 0, %s57
      %s60 = sphi 0, %s59
      %s74 = sphi 0, %s60
      %s78 = sphi 0, %s78
      %s80 = sphi 0, %s78
      %s81 = sphi 0, %s80
      %s95 = sphi 0, %s81
      %s99 = sphi 0, %s99
      %s101 = sphi 0, %s99
      %s102 = sphi 0, %s101
      %s116 = sphi 0, %s102
      %s120 = sphi 0, %s120
      %s122 = sphi 0, %s120
      %s123 = sphi 0, %s122
      %s137 = sphi 0, %s123
      %s143 = sphi 0, %s145
      %s146 = sphi 0, %s143
      %s147 = sphi 0, %s146
      %s163 = sphi 0, %s147
      %s169 = sphi 0, %s171
      %s172 = sphi 0, %s169
      %s173 = sphi 0, %s172
      %s189 = sphi 0, %s173
    $region4: #{tpu_custom_call.1} parent=1 // loop_header_branch
      %26 = sbr.rel (%p24) target = $region8
    $region5: #{tpu_custom_call.1} parent=1 // loop_body
      %s28 = ssub.s32 %s23, 1
      %s29 = ssub.s32 %s23, 2
      %s30 = sadd.s32 %s23, 1
      %s31 = ssub.s32 %s23, %s30
      %p32 = scmp.eq.s32.totalorder %s31, 0
      %s34 = sadd.s32 %s33, 1
      %s35 = scalar_select %p32, %s33, %s34
      %p38 = pneg %p32
      %p39 = scmp.eq.s32.totalorder %s23, 1
      %p40 = por %p38, %p39
      %p41 = scmp.ne.s32.totalorder %s33, %s36
      %p42 = scmp.eq.s32.totalorder %s23, 0
      %p43 = por %p41, %p42
      %p44 = scmp.ne.s32.totalorder %s33, %s36
      %p45 = scmp.eq.s32.totalorder %s28, 1
      %p46 = por %p44, %p45
      %p47 = scmp.ne.s32.totalorder %s36, %s37
      %p48 = scmp.eq.s32.totalorder %s28, 0
      %p49 = por %p47, %p48
      %p50 = scmp.ne.s32.totalorder %s36, %s37
      %p51 = scmp.eq.s32.totalorder %s29, 1
      %p52 = por %p50, %p51
      %p54 = scmp.ne.s32.totalorder %s37, %s53
      %p55 = scmp.eq.s32.totalorder %s29, 0
      %p56 = por %p54, %p55
      %s58 = sadd.s32 %s57, 1
      %p61 = scmp.eq.s32.totalorder %s23, 1
      %p62 = scmp.ne.s32.totalorder %s57, %s59
      %p63 = scmp.eq.s32.totalorder %s23, 0
      %p64 = por %p62, %p63
      %p65 = scmp.ne.s32.totalorder %s57, %s59
      %p66 = scmp.eq.s32.totalorder %s28, 1
      %p67 = por %p65, %p66
      %p68 = scmp.ne.s32.totalorder %s59, %s60
      %p69 = scmp.eq.s32.totalorder %s28, 0
      %p70 = por %p68, %p69
      %p71 = scmp.ne.s32.totalorder %s59, %s60
      %p72 = scmp.eq.s32.totalorder %s29, 1
      %p73 = por %p71, %p72
      %p75 = scmp.ne.s32.totalorder %s60, %s74
      %p76 = scmp.eq.s32.totalorder %s29, 0
      %p77 = por %p75, %p76
      %s79 = sadd.s32 %s78, 1
      %p82 = scmp.eq.s32.totalorder %s23, 1
      %p83 = scmp.ne.s32.totalorder %s78, %s80
      %p84 = scmp.eq.s32.totalorder %s23, 0
      %p85 = por %p83, %p84
      %p86 = scmp.ne.s32.totalorder %s78, %s80
      %p87 = scmp.eq.s32.totalorder %s28, 1
      %p88 = por %p86, %p87
      %p89 = scmp.ne.s32.totalorder %s80, %s81
      %p90 = scmp.eq.s32.totalorder %s28, 0
      %p91 = por %p89, %p90
      %p92 = scmp.ne.s32.totalorder %s80, %s81
      %p93 = scmp.eq.s32.totalorder %s29, 1
      %p94 = por %p92, %p93
      %p96 = scmp.ne.s32.totalorder %s81, %s95
      %p97 = scmp.eq.s32.totalorder %s29, 0
      %p98 = por %p96, %p97
      %s100 = sadd.s32 %s99, 1
      %p103 = scmp.eq.s32.totalorder %s23, 1
      %p104 = scmp.ne.s32.totalorder %s99, %s101
      %p105 = scmp.eq.s32.totalorder %s23, 0
      %p106 = por %p104, %p105
      %p107 = scmp.ne.s32.totalorder %s99, %s101
      %p108 = scmp.eq.s32.totalorder %s28, 1
      %p109 = por %p107, %p108
      %p110 = scmp.ne.s32.totalorder %s101, %s102
      %p111 = scmp.eq.s32.totalorder %s28, 0
      %p112 = por %p110, %p111
      %p113 = scmp.ne.s32.totalorder %s101, %s102
      %p114 = scmp.eq.s32.totalorder %s29, 1
      %p115 = por %p113, %p114
      %p117 = scmp.ne.s32.totalorder %s102, %s116
      %p118 = scmp.eq.s32.totalorder %s29, 0
      %p119 = por %p117, %p118
      %s121 = sadd.s32 %s120, 1
      %p124 = scmp.eq.s32.totalorder %s23, 1
      %p125 = scmp.ne.s32.totalorder %s120, %s122
      %p126 = scmp.eq.s32.totalorder %s23, 0
      %p127 = por %p125, %p126
      %p128 = scmp.ne.s32.totalorder %s120, %s122
      %p129 = scmp.eq.s32.totalorder %s28, 1
      %p130 = por %p128, %p129
      %p131 = scmp.ne.s32.totalorder %s122, %s123
      %p132 = scmp.eq.s32.totalorder %s28, 0
      %p133 = por %p131, %p132
      %p134 = scmp.ne.s32.totalorder %s122, %s123
      %p135 = scmp.eq.s32.totalorder %s29, 1
      %p136 = por %p134, %p135
      %p138 = scmp.ne.s32.totalorder %s123, %s137
      %p139 = scmp.eq.s32.totalorder %s29, 0
      %p140 = por %p138, %p139
      %s141 = ssub.s32 %s23, %s30
      %p142 = scmp.eq.s32.totalorder %s141, 0
      %s144 = sadd.s32 %s143, 1
      %s145 = scalar_select %p142, %s143, %s144
      %p148 = pneg %p142
      %p149 = scmp.eq.s32.totalorder %s23, 1
      %p150 = por %p148, %p149
      %p151 = scmp.ne.s32.totalorder %s143, %s146
      %p152 = scmp.eq.s32.totalorder %s23, 0
      %p153 = por %p151, %p152
      %p154 = scmp.ne.s32.totalorder %s143, %s146
      %p155 = scmp.eq.s32.totalorder %s28, 1
      %p156 = por %p154, %p155
      %p157 = scmp.ne.s32.totalorder %s146, %s147
      %p158 = scmp.eq.s32.totalorder %s28, 0
      %p159 = por %p157, %p158
      %p160 = scmp.ne.s32.totalorder %s146, %s147
      %p161 = scmp.eq.s32.totalorder %s29, 1
      %p162 = por %p160, %p161
      %p164 = scmp.ne.s32.totalorder %s147, %s163
      %p165 = scmp.eq.s32.totalorder %s29, 0
      %p166 = por %p164, %p165
      %s167 = ssub.s32 %s23, %s30
      %p168 = scmp.eq.s32.totalorder %s167, 0
      %s170 = sadd.s32 %s169, 1
      %s171 = scalar_select %p168, %s169, %s170
      %p174 = pneg %p168
      %p175 = scmp.eq.s32.totalorder %s23, 1
      %p176 = por %p174, %p175
      %p177 = scmp.ne.s32.totalorder %s169, %s172
      %p178 = scmp.eq.s32.totalorder %s23, 0
      %p179 = por %p177, %p178
      %p180 = scmp.ne.s32.totalorder %s169, %s172
      %p181 = scmp.eq.s32.totalorder %s28, 1
      %p182 = por %p180, %p181
      %p183 = scmp.ne.s32.totalorder %s172, %s173
      %p184 = scmp.eq.s32.totalorder %s28, 0
      %p185 = por %p183, %p184
      %p186 = scmp.ne.s32.totalorder %s172, %s173
      %p187 = scmp.eq.s32.totalorder %s29, 1
      %p188 = por %p186, %p187
      %p190 = scmp.ne.s32.totalorder %s173, %s189
      %p191 = scmp.eq.s32.totalorder %s29, 0
      %p192 = por %p190, %p191
      %p193 = scmp.le.s32.totalorder 1, %s23
      %p194 = scmp.lt.s32.totalorder %s23, 3
      %p195 = pnand %p193, %p194
      %p196 = pneg %p195
      // Predicated region
      $region9: #{tpu_custom_call.1} parent=5 // pred_check
        _
      $region10: #{tpu_custom_call.1} parent=5 // pred_check_branch
        %198 = sbr.rel (%p195) target = $region12
      $region11: #{tpu_custom_call.1} parent=5 // pred_region
        %s199 = ssub.s32 %s23, 1
        // Predicated region
        $region13: #{tpu_custom_call.1} parent=11 // pred_check
          %p200 = pneg %p70
        $region14: #{tpu_custom_call.1} parent=11 // pred_check_branch
          %202 = sbr.rel (%p200) target = $region16
        $region15: #{tpu_custom_call.1} parent=11 // pred_region
          %s204 = ssub.s32 1024, 1024
          %205 = vsyncadd [#allocation6], %s204
          %s206 = sshll.u32 [#allocation5], 4
          %s207 = int_to_ptr.vmem [resolvable:$true] %s206
          %212 = dma.hbm_to_vmem [thread:$0]  %s1, 1024, %s207, [#allocation6], 64, 64, 4
        $region16: #{tpu_custom_call.1} parent=11 // pred_fallthru
          _
        // Predicated region
        $region17: #{tpu_custom_call.1} parent=11 // pred_check
          %p213 = pneg %p91
        $region18: #{tpu_custom_call.1} parent=11 // pred_check_branch
          %215 = sbr.rel (%p213) target = $region20
        $region19: #{tpu_custom_call.1} parent=11 // pred_region
          _
        $region20: #{tpu_custom_call.1} parent=11 // pred_fallthru
          _
        // Predicated region
        $region21: #{tpu_custom_call.1} parent=11 // pred_check
          %p216 = pneg %p112
        $region22: #{tpu_custom_call.1} parent=11 // pred_check_branch
          %218 = sbr.rel (%p216) target = $region24
        $region23: #{tpu_custom_call.1} parent=11 // pred_region
          %s220 = ssub.s32 1024, 1024
          %221 = vsyncadd [#allocation6], %s220
          %s222 = sshll.u32 [#allocation7], 4
          %s223 = int_to_ptr.vmem [resolvable:$true] %s222
          %228 = dma.hbm_to_vmem [thread:$0]  %s3, 1024, %s223, [#allocation6], 64, 64, 4
        $region24: #{tpu_custom_call.1} parent=11 // pred_fallthru
          _
        // Predicated region
        $region25: #{tpu_custom_call.1} parent=11 // pred_check
          %p229 = pneg %p133
        $region26: #{tpu_custom_call.1} parent=11 // pred_check_branch
          %231 = sbr.rel (%p229) target = $region28
        $region27: #{tpu_custom_call.1} parent=11 // pred_region
          _
        $region28: #{tpu_custom_call.1} parent=11 // pred_fallthru
          _
      $region12: #{tpu_custom_call.1} parent=5 // pred_fallthru
        _
      %p232 = scmp.lt.s32.totalorder %s23, 2
      // Predicated region
      $region29: #{tpu_custom_call.1} parent=5 // pred_check
        %p233 = pneg %p232
      $region30: #{tpu_custom_call.1} parent=5 // pred_check_branch
        %235 = sbr.rel (%p233) target = $region32
      $region31: #{tpu_custom_call.1} parent=5 // pred_region
        // Predicated region
        $region33: #{tpu_custom_call.1} parent=31 // pred_check
          %p236 = pneg %p43
        $region34: #{tpu_custom_call.1} parent=31 // pred_check_branch
          %238 = sbr.rel (%p236) target = $region36
        $region35: #{tpu_custom_call.1} parent=31 // pred_region
          %s239 = sand.u32 %s33, 1
          %s240 = scalar_lea.sflag [#allocation3], %s239
          %s241 = sand.u32 %s33, 1
          %s242 = smul.addr %s241, 192
          %s243 = scalar_lea.vmem [#allocation2], %s242
          %s244 = smul.u32 24, %s23
          %s246 = ssub.s32 3072, 3072
          %247 = vsyncadd %s240, %s246
          %s248 = smul.addr %s244, 128
          %s249 = scalar_lea.hbm %s0, %s248
          %s250 = sshll.u32 %s243, 4
          %s251 = int_to_ptr.vmem [resolvable:$true] %s250
          %256 = dma.hbm_to_vmem [thread:$0]  %s249, 3072, %s251, %s240, 128, 128, 8
        $region36: #{tpu_custom_call.1} parent=31 // pred_fallthru
          _
      $region32: #{tpu_custom_call.1} parent=5 // pred_fallthru
        _
      %p257 = scmp.le.s32.totalorder 1, %s23
      %p258 = scmp.lt.s32.totalorder %s23, 3
      %p259 = pnand %p257, %p258
      %p260 = pneg %p259
      // Predicated region
      $region37: #{tpu_custom_call.1} parent=5 // pred_check
        _
      $region38: #{tpu_custom_call.1} parent=5 // pred_check_branch
        %262 = sbr.rel (%p259) target = $region40
      $region39: #{tpu_custom_call.1} parent=5 // pred_region
        %s263 = ssub.s32 %s23, 1
        %s264 = sand.u32 %s36, 1
        %s265 = scalar_lea.sflag [#allocation3], %s264
        %s266 = sand.u32 %s36, 1
        %s267 = smul.addr %s266, 192
        %s268 = scalar_lea.vmem [#allocation2], %s267
        // Predicated region
        $region41: #{tpu_custom_call.1} parent=39 // pred_check
          %p269 = pneg %p49
        $region42: #{tpu_custom_call.1} parent=39 // pred_check_branch
          %271 = sbr.rel (%p269) target = $region44
        $region43: #{tpu_custom_call.1} parent=39 // pred_region
          %272 = dma.done %s265, 3072
        $region44: #{tpu_custom_call.1} parent=39 // pred_fallthru
          _
        // Predicated region
        $region45: #{tpu_custom_call.1} parent=39 // pred_check
          %p273 = pneg %p70
        $region46: #{tpu_custom_call.1} parent=39 // pred_check_branch
          %275 = sbr.rel (%p273) target = $region48
        $region47: #{tpu_custom_call.1} parent=39 // pred_region
          %276 = dma.done [#allocation6], 1024
        $region48: #{tpu_custom_call.1} parent=39 // pred_fallthru
          _
        // Predicated region
        $region49: #{tpu_custom_call.1} parent=39 // pred_check
          %p277 = pneg %p112
        $region50: #{tpu_custom_call.1} parent=39 // pred_check_branch
          %279 = sbr.rel (%p277) target = $region52
        $region51: #{tpu_custom_call.1} parent=39 // pred_region
          %280 = dma.done [#allocation6], 1024
        $region52: #{tpu_custom_call.1} parent=39 // pred_fallthru
          _
        %s281 = sand.u32 %s36, 1
        %s282 = scalar_lea.sflag [#allocation3], %s281
        %s283 = sand.u32 %s36, 1
        %s284 = smul.addr %s283, 192
        %s285 = scalar_lea.vmem [#allocation2], %s284
        %p286 = pneg %p49
        %p287 = pneg %p46
        %p288 = pneg %p70
        %p289 = pneg %p67
        %p290 = pneg %p91
        %p291 = pneg %p88
        %p292 = pneg %p112
        %p293 = pneg %p109
        %p294 = pneg %p133
        %p295 = pneg %p130
        %p296 = pneg %p159
        %p297 = pneg %p156
        %s298 = sand.u32 %s146, 1
        %s299 = scalar_lea.sflag [#allocation4], %s298
        %s300 = sand.u32 %s146, 1
        %s301 = smul.addr %s300, 96
        %s302 = scalar_lea.vmem [#allocation8], %s301
        %p303 = pneg %p185
        %p304 = pneg %p182
        %s305 = sand.u32 %s172, 1
        %s306 = scalar_lea.sflag [#allocation10], %s305
        %s307 = sand.u32 %s172, 1
        %s308 = smul.addr %s307, 96
        %s309 = scalar_lea.vmem [#allocation9], %s308
        %s310 = smul.u32 24, %s28
        %s311 = smul.u32 24, %s28
        %s312 = smul.u32 24, %s28
        %v314 = vld [vmem:[%s268] sm:$0xff]
        %v315 = vld [vmem:[%s268 + $0x8] sm:$0xff]
        %v316 = vld [vmem:[%s268 + $0x10] sm:$0xff]
        %v317 = vld [vmem:[%s268 + $0x18] sm:$0xff]
        %v318 = vld [vmem:[%s268 + $0x20] sm:$0xff]
        %v319 = vld [vmem:[%s268 + $0x28] sm:$0xff]
        %v320 = vld [vmem:[%s268 + $0x30] sm:$0xff]
        %v321 = vld [vmem:[%s268 + $0x38] sm:$0xff]
        %v322 = vld [vmem:[%s268 + $0x40] sm:$0xff]
        %v323 = vld [vmem:[%s268 + $0x48] sm:$0xff]
        %v324 = vld [vmem:[%s268 + $0x50] sm:$0xff]
        %v325 = vld [vmem:[%s268 + $0x58] sm:$0xff]
        %v326 = vld [vmem:[%s268 + $0x60] sm:$0xff]
        %v327 = vld [vmem:[%s268 + $0x68] sm:$0xff]
        %v328 = vld [vmem:[%s268 + $0x70] sm:$0xff]
        %v329 = vld [vmem:[%s268 + $0x78] sm:$0xff]
        %v330 = vld [vmem:[%s268 + $0x80] sm:$0xff]
        %v331 = vld [vmem:[%s268 + $0x88] sm:$0xff]
        %v332 = vld [vmem:[%s268 + $0x90] sm:$0xff]
        %v333 = vld [vmem:[%s268 + $0x98] sm:$0xff]
        %v334 = vld [vmem:[%s268 + $0xa0] sm:$0xff]
        %v335 = vld [vmem:[%s268 + $0xa8] sm:$0xff]
        %v336 = vld [vmem:[%s268 + $0xb0] sm:$0xff]
        %v337 = vld [vmem:[%s268 + $0xb8] sm:$0xff]
        %v338 = vpack.c.bf16 %v315, %v314
        %v339 = vpack.c.bf16 %v317, %v316
        %v340 = vpack.c.bf16 %v319, %v318
        %v341 = vpack.c.bf16 %v321, %v320
        %v342 = vpack.c.bf16 %v323, %v322
        %v343 = vpack.c.bf16 %v325, %v324
        %v344 = vpack.c.bf16 %v327, %v326
        %v345 = vpack.c.bf16 %v329, %v328
        %v346 = vpack.c.bf16 %v331, %v330
        %v347 = vpack.c.bf16 %v333, %v332
        %v348 = vpack.c.bf16 %v335, %v334
        %v349 = vpack.c.bf16 %v337, %v336
        %v350 = vld [vmem:[#allocation5] sm:$0xf]
        %v351 = vld [vmem:[#allocation5 + $0x4] sm:$0xf]
        %v352 = vld [vmem:[#allocation5 + $0x8] sm:$0xf]
        %v353 = vld [vmem:[#allocation5 + $0xc] sm:$0xf]
        %v354 = vld [vmem:[#allocation5 + $0x10] sm:$0xf]
        %v355 = vld [vmem:[#allocation5 + $0x14] sm:$0xf]
        %v356 = vld [vmem:[#allocation5 + $0x18] sm:$0xf]
        %v357 = vld [vmem:[#allocation5 + $0x1c] sm:$0xf]
        %v358 = vld [vmem:[#allocation5 + $0x20] sm:$0xf]
        %v359 = vld [vmem:[#allocation5 + $0x24] sm:$0xf]
        %v360 = vld [vmem:[#allocation5 + $0x28] sm:$0xf]
        %v361 = vld [vmem:[#allocation5 + $0x2c] sm:$0xf]
        %v362 = vld [vmem:[#allocation5 + $0x30] sm:$0xf]
        %v363 = vld [vmem:[#allocation5 + $0x34] sm:$0xf]
        %v364 = vld [vmem:[#allocation5 + $0x38] sm:$0xf]
        %v365 = vld [vmem:[#allocation5 + $0x3c] sm:$0xf]
        %v366 = vld [vmem:[%s2] sm:$0x1]
        %v368 = vlaneseq
        %v369 = vshrl.u32 %v368, 7
        %v370 = vsub.s32 0, %v369
        %v371 = vrot.slane %v366, %v370
        %v389 = vunpack.c.l.b16 %v350
        %v390 = vunpack.c.l.b16 %v351
        %v391 = vunpack.c.l.b16 %v352
        %v392 = vunpack.c.l.b16 %v353
        %v393 = vunpack.c.l.b16 %v354
        %v394 = vunpack.c.l.b16 %v355
        %v395 = vunpack.c.l.b16 %v356
        %v396 = vunpack.c.l.b16 %v357
        %v397 = vunpack.c.l.b16 %v358
        %v398 = vunpack.c.l.b16 %v359
        %v399 = vunpack.c.l.b16 %v360
        %v400 = vunpack.c.l.b16 %v361
        %v401 = vunpack.c.l.b16 %v362
        %v402 = vunpack.c.l.b16 %v363
        %v403 = vunpack.c.l.b16 %v364
        %v404 = vunpack.c.l.b16 %v365
        %v405 = vpack.c.b16 %v390, %v389
        %v406 = vpack.c.b16 %v392, %v391
        %v407 = vpack.c.b16 %v394, %v393
        %v408 = vpack.c.b16 %v396, %v395
        %v409 = vpack.c.b16 %v398, %v397
        %v410 = vpack.c.b16 %v400, %v399
        %v411 = vpack.c.b16 %v402, %v401
        %v412 = vpack.c.b16 %v404, %v403
        %421 = vmatprep.subr.bf16.mxu0 0
        %422 = vmatpush1.bf16.msra.mxu0 %v412
        %423 = vmatprep.subr.bf16.mxu0 0
        %424 = vmatpush1.bf16.msra.mxu0 %v411
        %425 = vmatprep.subr.bf16.mxu0 0
        %426 = vmatpush1.bf16.msra.mxu0 %v410
        %427 = vmatprep.subr.bf16.mxu0 0
        %428 = vmatpush1.bf16.msra.mxu0 %v409
        %429 = vmatprep.subr.bf16.mxu0 0
        %430 = vmatpush1.bf16.msra.mxu0 %v408
        %431 = vmatprep.subr.bf16.mxu0 0
        %432 = vmatpush1.bf16.msra.mxu0 %v407
        %433 = vmatprep.subr.bf16.mxu0 0
        %434 = vmatpush1.bf16.msra.mxu0 %v406
        %435 = vmatprep.subr.bf16.mxu0 0
        %436 = vmatpush1.bf16.msra.mxu0 %v405
        %437 = vmatprep.subr.bf16.mxu0 0
        %438 = vmatpush2.bf16.msra.mxu0 0
        %439 = vmatprep.subr.bf16.mxu0 0
        %440 = vmatpush2.bf16.msra.mxu0 0
        %441 = vmatprep.subr.bf16.mxu0 0
        %442 = vmatpush2.bf16.msra.mxu0 0
        %443 = vmatprep.subr.bf16.mxu0 0
        %444 = vmatpush2.bf16.msra.mxu0 0
        %445 = vmatprep.subr.bf16.mxu0 0
        %446 = vmatpush2.bf16.msra.mxu0 0
        %447 = vmatprep.subr.bf16.mxu0 0
        %448 = vmatpush2.bf16.msra.mxu0 0
        %449 = vmatprep.subr.bf16.mxu0 0
        %450 = vmatpush2.bf16.msra.mxu0 0
        %451 = vmatprep.subr.bf16.mxu0 0
        %452 = vmatpush2.bf16.msra.mxu0 0
        %453 = vmatprep.mubr.bf16.mxu0 0
        %454 = vmatmul.mubr.bf16.gmra.mxu0 %v338
        %v455 = vpop.f32.mrf.mxu0
        %v456 = vadd.f32 %v371, %v455
        %v457 = vpop.f32.mrf.mxu0
        %v458 = vpop.f32.mrf.mxu0
        %v459 = vadd.f32 %v371, %v458
        %v460 = vpop.f32.mrf.mxu0
        %461 = vmatprep.mubr.bf16.mxu0 0
        %462 = vmatmul.mubr.bf16.gmra.mxu0 %v339
        %v463 = vpop.f32.mrf.mxu0
        %v464 = vadd.f32 %v371, %v463
        %v465 = vpop.f32.mrf.mxu0
        %v466 = vpop.f32.mrf.mxu0
        %v467 = vadd.f32 %v371, %v466
        %v468 = vpop.f32.mrf.mxu0
        %469 = vmatprep.mubr.bf16.mxu0 0
        %470 = vmatmul.mubr.bf16.gmra.mxu0 %v340
        %v471 = vpop.f32.mrf.mxu0
        %v472 = vadd.f32 %v371, %v471
        %v473 = vpop.f32.mrf.mxu0
        %v474 = vpop.f32.mrf.mxu0
        %v475 = vadd.f32 %v371, %v474
        %v476 = vpop.f32.mrf.mxu0
        %477 = vmatprep.mubr.bf16.mxu0 0
        %478 = vmatmul.mubr.bf16.gmra.mxu0 %v341
        %v479 = vpop.f32.mrf.mxu0
        %v480 = vadd.f32 %v371, %v479
        %v481 = vpop.f32.mrf.mxu0
        %v482 = vpop.f32.mrf.mxu0
        %v483 = vadd.f32 %v371, %v482
        %v484 = vpop.f32.mrf.mxu0
        %485 = vmatprep.mubr.bf16.mxu0 0
        %486 = vmatmul.mubr.bf16.gmra.mxu0 %v342
        %v487 = vpop.f32.mrf.mxu0
        %v488 = vadd.f32 %v371, %v487
        %v489 = vpop.f32.mrf.mxu0
        %v490 = vpop.f32.mrf.mxu0
        %v491 = vadd.f32 %v371, %v490
        %v492 = vpop.f32.mrf.mxu0
        %493 = vmatprep.mubr.bf16.mxu0 0
        %494 = vmatmul.mubr.bf16.gmra.mxu0 %v343
        %v495 = vpop.f32.mrf.mxu0
        %v496 = vadd.f32 %v371, %v495
        %v497 = vpop.f32.mrf.mxu0
        %v498 = vpop.f32.mrf.mxu0
        %v499 = vadd.f32 %v371, %v498
        %v500 = vpop.f32.mrf.mxu0
        %501 = vmatprep.mubr.bf16.mxu0 0
        %502 = vmatmul.mubr.bf16.gmra.mxu0 %v344
        %v503 = vpop.f32.mrf.mxu0
        %v504 = vadd.f32 %v371, %v503
        %v505 = vpop.f32.mrf.mxu0
        %v506 = vpop.f32.mrf.mxu0
        %v507 = vadd.f32 %v371, %v506
        %v508 = vpop.f32.mrf.mxu0
        %509 = vmatprep.mubr.bf16.mxu0 0
        %510 = vmatmul.mubr.bf16.gmra.mxu0 %v345
        %v511 = vpop.f32.mrf.mxu0
        %v512 = vadd.f32 %v371, %v511
        %v513 = vpop.f32.mrf.mxu0
        %v514 = vpop.f32.mrf.mxu0
        %v515 = vadd.f32 %v371, %v514
        %v516 = vpop.f32.mrf.mxu0
        %517 = vmatprep.mubr.bf16.mxu0 0
        %518 = vmatmul.mubr.bf16.gmra.mxu0 %v346
        %v519 = vpop.f32.mrf.mxu0
        %v520 = vadd.f32 %v371, %v519
        %v521 = vpop.f32.mrf.mxu0
        %v522 = vpop.f32.mrf.mxu0
        %v523 = vadd.f32 %v371, %v522
        %v524 = vpop.f32.mrf.mxu0
        %525 = vmatprep.mubr.bf16.mxu0 0
        %526 = vmatmul.mubr.bf16.gmra.mxu0 %v347
        %v527 = vpop.f32.mrf.mxu0
        %v528 = vadd.f32 %v371, %v527
        %v529 = vpop.f32.mrf.mxu0
        %v530 = vpop.f32.mrf.mxu0
        %v531 = vadd.f32 %v371, %v530
        %v532 = vpop.f32.mrf.mxu0
        %533 = vmatprep.mubr.bf16.mxu0 0
        %534 = vmatmul.mubr.bf16.gmra.mxu0 %v348
        %v535 = vpop.f32.mrf.mxu0
        %v536 = vadd.f32 %v371, %v535
        %v537 = vpop.f32.mrf.mxu0
        %v538 = vpop.f32.mrf.mxu0
        %v539 = vadd.f32 %v371, %v538
        %v540 = vpop.f32.mrf.mxu0
        %541 = vmatprep.mubr.bf16.mxu0 0
        %542 = vmatmul.mubr.bf16.gmra.mxu0 %v349
        %v543 = vpop.f32.mrf.mxu0
        %v544 = vadd.f32 %v371, %v543
        %v545 = vpop.f32.mrf.mxu0
        %v546 = vpop.f32.mrf.mxu0
        %v547 = vadd.f32 %v371, %v546
        %v548 = vpop.f32.mrf.mxu0
        %549 = vdwg.mxu0
        %v550 = vpack.c.bf16 %v459, %v456
        %v551 = vpack.c.bf16 %v467, %v464
        %v552 = vpack.c.bf16 %v475, %v472
        %v553 = vpack.c.bf16 %v483, %v480
        %v554 = vpack.c.bf16 %v491, %v488
        %v555 = vpack.c.bf16 %v499, %v496
        %v556 = vpack.c.bf16 %v507, %v504
        %v557 = vpack.c.bf16 %v515, %v512
        %v558 = vpack.c.bf16 %v523, %v520
        %v559 = vpack.c.bf16 %v531, %v528
        %v560 = vpack.c.bf16 %v539, %v536
        %v561 = vpack.c.bf16 %v547, %v544
        %v574 = vunpack.c.l.b16 %v550
        %v575 = vunpack.c.h.b16 %v550
        %v576 = vunpack.c.l.b16 %v551
        %v577 = vunpack.c.h.b16 %v551
        %v578 = vunpack.c.l.b16 %v552
        %v579 = vunpack.c.h.b16 %v552
        %v580 = vunpack.c.l.b16 %v553
        %v581 = vunpack.c.h.b16 %v553
        %v582 = vunpack.c.l.b16 %v554
        %v583 = vunpack.c.h.b16 %v554
        %v584 = vunpack.c.l.b16 %v555
        %v585 = vunpack.c.h.b16 %v555
        %v586 = vunpack.c.l.b16 %v556
        %v587 = vunpack.c.h.b16 %v556
        %v588 = vunpack.c.l.b16 %v557
        %v589 = vunpack.c.h.b16 %v557
        %v590 = vunpack.c.l.b16 %v558
        %v591 = vunpack.c.h.b16 %v558
        %v592 = vunpack.c.l.b16 %v559
        %v593 = vunpack.c.h.b16 %v559
        %v594 = vunpack.c.l.b16 %v560
        %v595 = vunpack.c.h.b16 %v560
        %v596 = vunpack.c.l.b16 %v561
        %v597 = vunpack.c.h.b16 %v561
        %v598 = vpack.c.b16 %v574, %v574
        %v599 = vpack.c.b16 %v575, %v575
        %v600 = vpack.c.b16 %v576, %v576
        %v601 = vpack.c.b16 %v577, %v577
        %v602 = vpack.c.b16 %v578, %v578
        %v603 = vpack.c.b16 %v579, %v579
        %v604 = vpack.c.b16 %v580, %v580
        %v605 = vpack.c.b16 %v581, %v581
        %v606 = vpack.c.b16 %v582, %v582
        %v607 = vpack.c.b16 %v583, %v583
        %v608 = vpack.c.b16 %v584, %v584
        %v609 = vpack.c.b16 %v585, %v585
        %v610 = vpack.c.b16 %v586, %v586
        %v611 = vpack.c.b16 %v587, %v587
        %v612 = vpack.c.b16 %v588, %v588
        %v613 = vpack.c.b16 %v589, %v589
        %v614 = vpack.c.b16 %v590, %v590
        %v615 = vpack.c.b16 %v591, %v591
        %v616 = vpack.c.b16 %v592, %v592
        %v617 = vpack.c.b16 %v593, %v593
        %v618 = vpack.c.b16 %v594, %v594
        %v619 = vpack.c.b16 %v595, %v595
        %v620 = vpack.c.b16 %v596, %v596
        %v621 = vpack.c.b16 %v597, %v597
        %646 = vst [vmem:[%s302] sm:$0xf] %v598
        %647 = vst [vmem:[%s302 + $0x4] sm:$0xf] %v599
        %648 = vst [vmem:[%s302 + $0x8] sm:$0xf] %v600
        %649 = vst [vmem:[%s302 + $0xc] sm:$0xf] %v601
        %650 = vst [vmem:[%s302 + $0x10] sm:$0xf] %v602
        %651 = vst [vmem:[%s302 + $0x14] sm:$0xf] %v603
        %652 = vst [vmem:[%s302 + $0x18] sm:$0xf] %v604
        %653 = vst [vmem:[%s302 + $0x1c] sm:$0xf] %v605
        %654 = vst [vmem:[%s302 + $0x20] sm:$0xf] %v606
        %655 = vst [vmem:[%s302 + $0x24] sm:$0xf] %v607
        %656 = vst [vmem:[%s302 + $0x28] sm:$0xf] %v608
        %657 = vst [vmem:[%s302 + $0x2c] sm:$0xf] %v609
        %658 = vst [vmem:[%s302 + $0x30] sm:$0xf] %v610
        %659 = vst [vmem:[%s302 + $0x34] sm:$0xf] %v611
        %660 = vst [vmem:[%s302 + $0x38] sm:$0xf] %v612
        %661 = vst [vmem:[%s302 + $0x3c] sm:$0xf] %v613
        %662 = vst [vmem:[%s302 + $0x40] sm:$0xf] %v614
        %663 = vst [vmem:[%s302 + $0x44] sm:$0xf] %v615
        %664 = vst [vmem:[%s302 + $0x48] sm:$0xf] %v616
        %665 = vst [vmem:[%s302 + $0x4c] sm:$0xf] %v617
        %666 = vst [vmem:[%s302 + $0x50] sm:$0xf] %v618
        %667 = vst [vmem:[%s302 + $0x54] sm:$0xf] %v619
        %668 = vst [vmem:[%s302 + $0x58] sm:$0xf] %v620
        %669 = vst [vmem:[%s302 + $0x5c] sm:$0xf] %v621
        %v670 = vld [vmem:[#allocation7] sm:$0xf]
        %v671 = vld [vmem:[#allocation7 + $0x4] sm:$0xf]
        %v672 = vld [vmem:[#allocation7 + $0x8] sm:$0xf]
        %v673 = vld [vmem:[#allocation7 + $0xc] sm:$0xf]
        %v674 = vld [vmem:[#allocation7 + $0x10] sm:$0xf]
        %v675 = vld [vmem:[#allocation7 + $0x14] sm:$0xf]
        %v676 = vld [vmem:[#allocation7 + $0x18] sm:$0xf]
        %v677 = vld [vmem:[#allocation7 + $0x1c] sm:$0xf]
        %v678 = vld [vmem:[#allocation7 + $0x20] sm:$0xf]
        %v679 = vld [vmem:[#allocation7 + $0x24] sm:$0xf]
        %v680 = vld [vmem:[#allocation7 + $0x28] sm:$0xf]
        %v681 = vld [vmem:[#allocation7 + $0x2c] sm:$0xf]
        %v682 = vld [vmem:[#allocation7 + $0x30] sm:$0xf]
        %v683 = vld [vmem:[#allocation7 + $0x34] sm:$0xf]
        %v684 = vld [vmem:[#allocation7 + $0x38] sm:$0xf]
        %v685 = vld [vmem:[#allocation7 + $0x3c] sm:$0xf]
        %v686 = vld [vmem:[%s4] sm:$0x1]
        %v688 = vlaneseq
        %v689 = vshrl.u32 %v688, 7
        %v690 = vsub.s32 0, %v689
        %v691 = vrot.slane %v686, %v690
        %v709 = vunpack.c.l.b16 %v670
        %v710 = vunpack.c.l.b16 %v671
        %v711 = vunpack.c.l.b16 %v672
        %v712 = vunpack.c.l.b16 %v673
        %v713 = vunpack.c.l.b16 %v674
        %v714 = vunpack.c.l.b16 %v675
        %v715 = vunpack.c.l.b16 %v676
        %v716 = vunpack.c.l.b16 %v677
        %v717 = vunpack.c.l.b16 %v678
        %v718 = vunpack.c.l.b16 %v679
        %v719 = vunpack.c.l.b16 %v680
        %v720 = vunpack.c.l.b16 %v681
        %v721 = vunpack.c.l.b16 %v682
        %v722 = vunpack.c.l.b16 %v683
        %v723 = vunpack.c.l.b16 %v684
        %v724 = vunpack.c.l.b16 %v685
        %v725 = vpack.c.b16 %v710, %v709
        %v726 = vpack.c.b16 %v712, %v711
        %v727 = vpack.c.b16 %v714, %v713
        %v728 = vpack.c.b16 %v716, %v715
        %v729 = vpack.c.b16 %v718, %v717
        %v730 = vpack.c.b16 %v720, %v719
        %v731 = vpack.c.b16 %v722, %v721
        %v732 = vpack.c.b16 %v724, %v723
        %741 = vmatprep.subr.bf16.mxu0 0
        %742 = vmatpush1.bf16.msra.mxu0 %v732
        %743 = vmatprep.subr.bf16.mxu0 0
        %744 = vmatpush1.bf16.msra.mxu0 %v731
        %745 = vmatprep.subr.bf16.mxu0 0
        %746 = vmatpush1.bf16.msra.mxu0 %v730
        %747 = vmatprep.subr.bf16.mxu0 0
        %748 = vmatpush1.bf16.msra.mxu0 %v729
        %749 = vmatprep.subr.bf16.mxu0 0
        %750 = vmatpush1.bf16.msra.mxu0 %v728
        %751 = vmatprep.subr.bf16.mxu0 0
        %752 = vmatpush1.bf16.msra.mxu0 %v727
        %753 = vmatprep.subr.bf16.mxu0 0
        %754 = vmatpush1.bf16.msra.mxu0 %v726
        %755 = vmatprep.subr.bf16.mxu0 0
        %756 = vmatpush1.bf16.msra.mxu0 %v725
        %757 = vmatprep.subr.bf16.mxu0 0
        %758 = vmatpush2.bf16.msra.mxu0 0
        %759 = vmatprep.subr.bf16.mxu0 0
        %760 = vmatpush2.bf16.msra.mxu0 0
        %761 = vmatprep.subr.bf16.mxu0 0
        %762 = vmatpush2.bf16.msra.mxu0 0
        %763 = vmatprep.subr.bf16.mxu0 0
        %764 = vmatpush2.bf16.msra.mxu0 0
        %765 = vmatprep.subr.bf16.mxu0 0
        %766 = vmatpush2.bf16.msra.mxu0 0
        %767 = vmatprep.subr.bf16.mxu0 0
        %768 = vmatpush2.bf16.msra.mxu0 0
        %769 = vmatprep.subr.bf16.mxu0 0
        %770 = vmatpush2.bf16.msra.mxu0 0
        %771 = vmatprep.subr.bf16.mxu0 0
        %772 = vmatpush2.bf16.msra.mxu0 0
        %773 = vmatprep.mubr.bf16.mxu0 0
        %774 = vmatmul.mubr.bf16.gmra.mxu0 %v550
        %v775 = vpop.f32.mrf.mxu0
        %v776 = vadd.f32 %v691, %v775
        %v777 = vpop.f32.mrf.mxu0
        %v778 = vpop.f32.mrf.mxu0
        %v779 = vadd.f32 %v691, %v778
        %v780 = vpop.f32.mrf.mxu0
        %781 = vmatprep.mubr.bf16.mxu0 0
        %782 = vmatmul.mubr.bf16.gmra.mxu0 %v551
        %v783 = vpop.f32.mrf.mxu0
        %v784 = vadd.f32 %v691, %v783
        %v785 = vpop.f32.mrf.mxu0
        %v786 = vpop.f32.mrf.mxu0
        %v787 = vadd.f32 %v691, %v786
        %v788 = vpop.f32.mrf.mxu0
        %789 = vmatprep.mubr.bf16.mxu0 0
        %790 = vmatmul.mubr.bf16.gmra.mxu0 %v552
        %v791 = vpop.f32.mrf.mxu0
        %v792 = vadd.f32 %v691, %v791
        %v793 = vpop.f32.mrf.mxu0
        %v794 = vpop.f32.mrf.mxu0
        %v795 = vadd.f32 %v691, %v794
        %v796 = vpop.f32.mrf.mxu0
        %797 = vmatprep.mubr.bf16.mxu0 0
        %798 = vmatmul.mubr.bf16.gmra.mxu0 %v553
        %v799 = vpop.f32.mrf.mxu0
        %v800 = vadd.f32 %v691, %v799
        %v801 = vpop.f32.mrf.mxu0
        %v802 = vpop.f32.mrf.mxu0
        %v803 = vadd.f32 %v691, %v802
        %v804 = vpop.f32.mrf.mxu0
        %805 = vmatprep.mubr.bf16.mxu0 0
        %806 = vmatmul.mubr.bf16.gmra.mxu0 %v554
        %v807 = vpop.f32.mrf.mxu0
        %v808 = vadd.f32 %v691, %v807
        %v809 = vpop.f32.mrf.mxu0
        %v810 = vpop.f32.mrf.mxu0
        %v811 = vadd.f32 %v691, %v810
        %v812 = vpop.f32.mrf.mxu0
        %813 = vmatprep.mubr.bf16.mxu0 0
        %814 = vmatmul.mubr.bf16.gmra.mxu0 %v555
        %v815 = vpop.f32.mrf.mxu0
        %v816 = vadd.f32 %v691, %v815
        %v817 = vpop.f32.mrf.mxu0
        %v818 = vpop.f32.mrf.mxu0
        %v819 = vadd.f32 %v691, %v818
        %v820 = vpop.f32.mrf.mxu0
        %821 = vmatprep.mubr.bf16.mxu0 0
        %822 = vmatmul.mubr.bf16.gmra.mxu0 %v556
        %v823 = vpop.f32.mrf.mxu0
        %v824 = vadd.f32 %v691, %v823
        %v825 = vpop.f32.mrf.mxu0
        %v826 = vpop.f32.mrf.mxu0
        %v827 = vadd.f32 %v691, %v826
        %v828 = vpop.f32.mrf.mxu0
        %829 = vmatprep.mubr.bf16.mxu0 0
        %830 = vmatmul.mubr.bf16.gmra.mxu0 %v557
        %v831 = vpop.f32.mrf.mxu0
        %v832 = vadd.f32 %v691, %v831
        %v833 = vpop.f32.mrf.mxu0
        %v834 = vpop.f32.mrf.mxu0
        %v835 = vadd.f32 %v691, %v834
        %v836 = vpop.f32.mrf.mxu0
        %837 = vmatprep.mubr.bf16.mxu0 0
        %838 = vmatmul.mubr.bf16.gmra.mxu0 %v558
        %v839 = vpop.f32.mrf.mxu0
        %v840 = vadd.f32 %v691, %v839
        %v841 = vpop.f32.mrf.mxu0
        %v842 = vpop.f32.mrf.mxu0
        %v843 = vadd.f32 %v691, %v842
        %v844 = vpop.f32.mrf.mxu0
        %845 = vmatprep.mubr.bf16.mxu0 0
        %846 = vmatmul.mubr.bf16.gmra.mxu0 %v559
        %v847 = vpop.f32.mrf.mxu0
        %v848 = vadd.f32 %v691, %v847
        %v849 = vpop.f32.mrf.mxu0
        %v850 = vpop.f32.mrf.mxu0
        %v851 = vadd.f32 %v691, %v850
        %v852 = vpop.f32.mrf.mxu0
        %853 = vmatprep.mubr.bf16.mxu0 0
        %854 = vmatmul.mubr.bf16.gmra.mxu0 %v560
        %v855 = vpop.f32.mrf.mxu0
        %v856 = vadd.f32 %v691, %v855
        %v857 = vpop.f32.mrf.mxu0
        %v858 = vpop.f32.mrf.mxu0
        %v859 = vadd.f32 %v691, %v858
        %v860 = vpop.f32.mrf.mxu0
        %861 = vmatprep.mubr.bf16.mxu0 0
        %862 = vmatmul.mubr.bf16.gmra.mxu0 %v561
        %v863 = vpop.f32.mrf.mxu0
        %v864 = vadd.f32 %v691, %v863
        %v865 = vpop.f32.mrf.mxu0
        %v866 = vpop.f32.mrf.mxu0
        %v867 = vadd.f32 %v691, %v866
        %v868 = vpop.f32.mrf.mxu0
        %869 = vdwg.mxu0
        %v870 = vpack.c.bf16 %v779, %v776
        %v871 = vpack.c.bf16 %v787, %v784
        %v872 = vpack.c.bf16 %v795, %v792
        %v873 = vpack.c.bf16 %v803, %v800
        %v874 = vpack.c.bf16 %v811, %v808
        %v875 = vpack.c.bf16 %v819, %v816
        %v876 = vpack.c.bf16 %v827, %v824
        %v877 = vpack.c.bf16 %v835, %v832
        %v878 = vpack.c.bf16 %v843, %v840
        %v879 = vpack.c.bf16 %v851, %v848
        %v880 = vpack.c.bf16 %v859, %v856
        %v881 = vpack.c.bf16 %v867, %v864
        %v894 = vunpack.c.l.b16 %v870
        %v895 = vunpack.c.h.b16 %v870
        %v896 = vunpack.c.l.b16 %v871
        %v897 = vunpack.c.h.b16 %v871
        %v898 = vunpack.c.l.b16 %v872
        %v899 = vunpack.c.h.b16 %v872
        %v900 = vunpack.c.l.b16 %v873
        %v901 = vunpack.c.h.b16 %v873
        %v902 = vunpack.c.l.b16 %v874
        %v903 = vunpack.c.h.b16 %v874
        %v904 = vunpack.c.l.b16 %v875
        %v905 = vunpack.c.h.b16 %v875
        %v906 = vunpack.c.l.b16 %v876
        %v907 = vunpack.c.h.b16 %v876
        %v908 = vunpack.c.l.b16 %v877
        %v909 = vunpack.c.h.b16 %v877
        %v910 = vunpack.c.l.b16 %v878
        %v911 = vunpack.c.h.b16 %v878
        %v912 = vunpack.c.l.b16 %v879
        %v913 = vunpack.c.h.b16 %v879
        %v914 = vunpack.c.l.b16 %v880
        %v915 = vunpack.c.h.b16 %v880
        %v916 = vunpack.c.l.b16 %v881
        %v917 = vunpack.c.h.b16 %v881
        %v918 = vpack.c.b16 %v894, %v894
        %v919 = vpack.c.b16 %v895, %v895
        %v920 = vpack.c.b16 %v896, %v896
        %v921 = vpack.c.b16 %v897, %v897
        %v922 = vpack.c.b16 %v898, %v898
        %v923 = vpack.c.b16 %v899, %v899
        %v924 = vpack.c.b16 %v900, %v900
        %v925 = vpack.c.b16 %v901, %v901
        %v926 = vpack.c.b16 %v902, %v902
        %v927 = vpack.c.b16 %v903, %v903
        %v928 = vpack.c.b16 %v904, %v904
        %v929 = vpack.c.b16 %v905, %v905
        %v930 = vpack.c.b16 %v906, %v906
        %v931 = vpack.c.b16 %v907, %v907
        %v932 = vpack.c.b16 %v908, %v908
        %v933 = vpack.c.b16 %v909, %v909
        %v934 = vpack.c.b16 %v910, %v910
        %v935 = vpack.c.b16 %v911, %v911
        %v936 = vpack.c.b16 %v912, %v912
        %v937 = vpack.c.b16 %v913, %v913
        %v938 = vpack.c.b16 %v914, %v914
        %v939 = vpack.c.b16 %v915, %v915
        %v940 = vpack.c.b16 %v916, %v916
        %v941 = vpack.c.b16 %v917, %v917
        %966 = vst [vmem:[%s309] sm:$0xf] %v918
        %967 = vst [vmem:[%s309 + $0x4] sm:$0xf] %v919
        %968 = vst [vmem:[%s309 + $0x8] sm:$0xf] %v920
        %969 = vst [vmem:[%s309 + $0xc] sm:$0xf] %v921
        %970 = vst [vmem:[%s309 + $0x10] sm:$0xf] %v922
        %971 = vst [vmem:[%s309 + $0x14] sm:$0xf] %v923
        %972 = vst [vmem:[%s309 + $0x18] sm:$0xf] %v924
        %973 = vst [vmem:[%s309 + $0x1c] sm:$0xf] %v925
        %974 = vst [vmem:[%s309 + $0x20] sm:$0xf] %v926
        %975 = vst [vmem:[%s309 + $0x24] sm:$0xf] %v927
        %976 = vst [vmem:[%s309 + $0x28] sm:$0xf] %v928
        %977 = vst [vmem:[%s309 + $0x2c] sm:$0xf] %v929
        %978 = vst [vmem:[%s309 + $0x30] sm:$0xf] %v930
        %979 = vst [vmem:[%s309 + $0x34] sm:$0xf] %v931
        %980 = vst [vmem:[%s309 + $0x38] sm:$0xf] %v932
        %981 = vst [vmem:[%s309 + $0x3c] sm:$0xf] %v933
        %982 = vst [vmem:[%s309 + $0x40] sm:$0xf] %v934
        %983 = vst [vmem:[%s309 + $0x44] sm:$0xf] %v935
        %984 = vst [vmem:[%s309 + $0x48] sm:$0xf] %v936
        %985 = vst [vmem:[%s309 + $0x4c] sm:$0xf] %v937
        %986 = vst [vmem:[%s309 + $0x50] sm:$0xf] %v938
        %987 = vst [vmem:[%s309 + $0x54] sm:$0xf] %v939
        %988 = vst [vmem:[%s309 + $0x58] sm:$0xf] %v940
        %989 = vst [vmem:[%s309 + $0x5c] sm:$0xf] %v941
        %s990 = sand.u32 %s146, 1
        %s991 = scalar_lea.sflag [#allocation4], %s990
        %s992 = sand.u32 %s146, 1
        %s993 = smul.addr %s992, 96
        %s994 = scalar_lea.vmem [#allocation8], %s993
        %s995 = sand.u32 %s172, 1
        %s996 = scalar_lea.sflag [#allocation10], %s995
        %s997 = sand.u32 %s172, 1
        %s998 = smul.addr %s997, 96
        %s999 = scalar_lea.vmem [#allocation9], %s998
        // Predicated region
        $region53: #{tpu_custom_call.1} parent=39 // pred_check
          %p1000 = pneg %p156
        $region54: #{tpu_custom_call.1} parent=39 // pred_check_branch
          %1002 = sbr.rel (%p1000) target = $region56
        $region55: #{tpu_custom_call.1} parent=39 // pred_region
          %s1003 = smul.u32 24, %s28
          %s1005 = ssub.s32 1536, 1536
          %1006 = vsyncadd %s991, %s1005
          %s1007 = smul.addr %s1003, 64
          %s1008 = scalar_lea.hbm %s5, %s1007
          %s1009 = sshll.u32 %s994, 4
          %s1010 = int_to_ptr.vmem [resolvable:$true] %s1009
          %1015 = dma.vmem_to_hbm [thread:$0]  %s1010, 1536, %s1008, %s991, 64, 64, 4
        $region56: #{tpu_custom_call.1} parent=39 // pred_fallthru
          _
        // Predicated region
        $region57: #{tpu_custom_call.1} parent=39 // pred_check
          %p1016 = pneg %p182
        $region58: #{tpu_custom_call.1} parent=39 // pred_check_branch
          %1018 = sbr.rel (%p1016) target = $region60
        $region59: #{tpu_custom_call.1} parent=39 // pred_region
          %s1019 = smul.u32 24, %s28
          %s1021 = ssub.s32 1536, 1536
          %1022 = vsyncadd %s996, %s1021
          %s1023 = smul.addr %s1019, 64
          %s1024 = scalar_lea.hbm %s6, %s1023
          %s1025 = sshll.u32 %s999, 4
          %s1026 = int_to_ptr.vmem [resolvable:$true] %s1025
          %1031 = dma.vmem_to_hbm [thread:$0]  %s1026, 1536, %s1024, %s996, 64, 64, 4
        $region60: #{tpu_custom_call.1} parent=39 // pred_fallthru
          _
      $region40: #{tpu_custom_call.1} parent=5 // pred_fallthru
        _
      %p1032 = scmp.le.s32.totalorder 2, %s23
      // Predicated region
      $region61: #{tpu_custom_call.1} parent=5 // pred_check
        %p1033 = pneg %p1032
      $region62: #{tpu_custom_call.1} parent=5 // pred_check_branch
        %1035 = sbr.rel (%p1033) target = $region64
      $region63: #{tpu_custom_call.1} parent=5 // pred_region
        %s1036 = ssub.s32 %s23, 2
        // Predicated region
        $region65: #{tpu_custom_call.1} parent=63 // pred_check
          %p1037 = pneg %p162
        $region66: #{tpu_custom_call.1} parent=63 // pred_check_branch
          %1039 = sbr.rel (%p1037) target = $region68
        $region67: #{tpu_custom_call.1} parent=63 // pred_region
          %s1040 = sand.u32 %s147, 1
          %s1041 = scalar_lea.sflag [#allocation4], %s1040
          %s1042 = sand.u32 %s147, 1
          %s1043 = smul.addr %s1042, 96
          %s1044 = scalar_lea.vmem [#allocation8], %s1043
          %1045 = dma.done %s1041, 1536
        $region68: #{tpu_custom_call.1} parent=63 // pred_fallthru
          _
        // Predicated region
        $region69: #{tpu_custom_call.1} parent=63 // pred_check
          %p1046 = pneg %p188
        $region70: #{tpu_custom_call.1} parent=63 // pred_check_branch
          %1048 = sbr.rel (%p1046) target = $region72
        $region71: #{tpu_custom_call.1} parent=63 // pred_region
          %s1049 = sand.u32 %s173, 1
          %s1050 = scalar_lea.sflag [#allocation10], %s1049
          %s1051 = sand.u32 %s173, 1
          %s1052 = smul.addr %s1051, 96
          %s1053 = scalar_lea.vmem [#allocation9], %s1052
          %1054 = dma.done %s1050, 1536
        $region72: #{tpu_custom_call.1} parent=63 // pred_fallthru
          _
      $region64: #{tpu_custom_call.1} parent=5 // pred_fallthru
        _
    $region6: #{tpu_custom_call.1} parent=1 // loop_footer
      %s27 = sadd.s32 1, %s23
    $region7: #{tpu_custom_call.1} parent=1 // loop_footer_branch
      %22 = sbr.rel target = $region3
    $region8: #{tpu_custom_call.1} parent=1 // loop_exit
      _
    %1055 = vsyncpa [#allocation3], 1
    %s1056 = scalar_lea.sflag [#allocation3], 1
    %1057 = vsyncpa %s1056, 1
    %1058 = vsyncpa [#allocation6], 1
    %1059 = vsyncpa [#allocation4], 1
    %s1060 = scalar_lea.sflag [#allocation4], 1
    %1061 = vsyncpa %s1060, 1
    %1062 = vsyncpa [#allocation10], 1
    %s1063 = scalar_lea.sflag [#allocation10], 1
    %1064 = vsyncpa %s1063, 1

</llo_original>
